<compile_context>
chip_gen: v6e
topology: v6e:2x2x1
jax: 0.10.0
libtpu: 0.0.40
codegen_flags: <defaults>
</compile_context>

<pallas_src>
import functools

import jax
import jax.numpy as jnp
from jax import lax
from jax.experimental import pallas as pl
from jax.experimental.pallas import tpu as pltpu

# constants matching the PyTorch module defaults
BCE_SMOOTH = 1e-8            # WeightedBCELoss.smooth
DICE_SMOOTH = 1e-6           # BinaryDiceLoss.smooth
POS_W0, POS_W1 = 1.0, 1.0    # pos_weight
LOSS_W0, LOSS_W1 = 1.0, 1.0  # loss_weight
_LANES = 128


def _cdiv(a, b):
    return -(-a // b)


def _round_up(x, m):
    return ((x + m - 1) // m) * m


def _bce_dice_kernel(p_ref, t_ref, o_ref, bce_acc, num_acc, den_acc, *,
                     tr, inv_l, num_k, tail_valid, needs_mask, hard_targets):
    # p_ref / t_ref : (1, TR, 128) input tiles (f32 or bf16)
    # o_ref         : (1, 8, 128) f32 output tile (loss broadcast, lane-dense store)
    # *_acc         : (8, 128) f32 accumulators, persistent across the K axis
    k = pl.program_id(1)

    @pl.when(k == 0)
    def _():
        bce_acc[...] = jnp.zeros_like(bce_acc)
        num_acc[...] = jnp.zeros_like(num_acc)
        den_acc[...] = jnp.zeros_like(den_acc)

    def accumulate(masked):
        p = p_ref[0].astype(jnp.float32)   # (TR, 128)
        t = t_ref[0].astype(jnp.float32)
        if masked:
            # Tail tile: zero out elements past the true flattened length so
            # out-of-bounds / lane-padding data contributes exactly 0 and can
            # never produce NaN in the logs.
            row = lax.broadcasted_iota(jnp.int32, (tr, _LANES), 0)
            lane = lax.broadcasted_iota(jnp.int32, (tr, _LANES), 1)
            m = (row * _LANES + lane) < tail_valid
            p = jnp.where(m, p, 0.0)
            t = jnp.where(m, t, 0.0)

        # ---- WeightedBCELoss elementwise term (pos_weight = [1, 1]) ----
        pc = jnp.maximum(p, BCE_SMOOTH)  # predict.clamp(min=smooth)
        if hard_targets:
            # Single-log fast path, exact for targets in {0, 1} with pos_weight=[1,1].
            bce = -jnp.log(jnp.where(t > 0.5, pc + BCE_SMOOTH, 1.0 - pc + BCE_SMOOTH)) \
                  * (1.0 / (POS_W0 + POS_W1))
        else:
            log1 = jnp.log(pc + BCE_SMOOTH)
            log0 = jnp.log(1.0 - pc + BCE_SMOOTH)
            # t*w0*log1 + (1-t)*w1*log0  ==  w1*log0 + t*(w0*log1 - w1*log0)
            bce = -(POS_W1 * log0 + t * (POS_W0 * log1 - POS_W1 * log0)) \
                  * (1.0 / (POS_W0 + POS_W1))
        if masked:
            bce = jnp.where(m, bce, 0.0)

        # Fold each quantity to (8,128) with pure vreg adds (no per-element XLU,
        # no full-tile accumulator read-modify-write).
        groups = tr // 8
        bce_acc[...] += jnp.sum(bce.reshape(groups, 8, _LANES), axis=0)
        num_acc[...] += jnp.sum((p * t).reshape(groups, 8, _LANES), axis=0)
        den_acc[...] += jnp.sum((p * p + t * t).reshape(groups, 8, _LANES), axis=0)

    if needs_mask:
        if num_k > 1:
            @pl.when(k < num_k - 1)
            def _():
                accumulate(False)

        @pl.when(k == num_k - 1)
        def _():
            accumulate(True)
    else:
        accumulate(False)

    @pl.when(k == num_k - 1)
    def _():
        bce_mean = jnp.sum(bce_acc[...], keepdims=True) * inv_l             # (1, 1)
        num = 2.0 * jnp.sum(num_acc[...], keepdims=True) + DICE_SMOOTH
        den = jnp.sum(den_acc[...], keepdims=True) + DICE_SMOOTH
        dice = 1.0 - num / den
        loss = (LOSS_W0 * bce_mean + LOSS_W1 * dice) * (1.0 / (LOSS_W0 + LOSS_W1))
        o_ref[...] = jnp.broadcast_to(loss, o_ref.shape).astype(o_ref.dtype)


def bce_dice_loss(predict, target, *, row_block=None, hard_targets=False):
    """predict, target: [N, ...] (same shape) -> per-batch loss [N] float32.

    Matches BCE_DiceLoss defaults (pos_weight=[1,1], loss_weight=[1,1],
    reduction='none', sce=False, gdice=False). As in the PyTorch module,
    `predict` must already be probabilities in (0, 1).
    Set hard_targets=True only if targets are exactly {0, 1} (single-log path).
    """
    assert predict.shape == target.shape, "predict & target shapes don't match"
    N = int(predict.shape[0])
    L = 1
    for d in predict.shape[1:]:
        L *= int(d)
    assert N > 0 and L > 0

    # Keep bf16 inputs in bf16 over HBM->VMEM (halves DMA bytes); else f32.
    if predict.dtype == jnp.bfloat16 and target.dtype == jnp.bfloat16:
        in_dtype, sub, itemsize = jnp.bfloat16, 16, 2   # bf16 packs 16 sublanes
    else:
        in_dtype, sub, itemsize = jnp.float32, 8, 4

    if row_block is None:
        row_block = 8192 if itemsize == 2 else 4096     # ~2 MiB per input tile

    p2 = predict.reshape(N, L).astype(in_dtype)
    t2 = target.reshape(N, L).astype(in_dtype)

    # Lane-dense (N, R, 128) layout. Only pad (<= 127 elems/row) when L is not
    # 128-aligned; padded values are masked in-kernel anyway.
    r_raw = _cdiv(L, _LANES)
    lane_pad = r_raw * _LANES - L
    if lane_pad:
        # TODO(synk): this costs one extra HBM round trip of the inputs; only
        # taken when the flattened per-sample length is not a multiple of 128.
        p2 = jnp.pad(p2, ((0, 0), (0, lane_pad)))
        t2 = jnp.pad(t2, ((0, 0), (0, lane_pad)))
    p3 = p2.reshape(N, r_raw, _LANES)
    t3 = t2.reshape(N, r_raw, _LANES)

    # Balanced reduction tiles; only the LAST tile may extend past r_raw rows.
    num_k0 = _cdiv(r_raw, int(row_block))
    tr = _round_up(_cdiv(r_raw, num_k0), sub)
    num_k = _cdiv(r_raw, tr)
    tail_valid = L - (num_k - 1) * tr * _LANES          # > 0 by construction
    needs_mask = (num_k * tr * _LANES) != L

    kernel = functools.partial(
        _bce_dice_kernel, tr=tr, inv_l=1.0 / float(L), num_k=num_k,
        tail_valid=tail_valid, needs_mask=needs_mask, hard_targets=hard_targets)

    in_tile_bytes = tr * _LANES * itemsize
    vmem_limit = int(min(max(4 * in_tile_bytes + (2 << 20), 16 << 20), 32 << 20))
    cost = pl.CostEstimate(
        flops=12 * N * L,
        transcendentals=(1 if hard_targets else 2) * N * L,
        bytes_accessed=2 * N * num_k * tr * _LANES * itemsize + N * 8 * _LANES * 4,
    )

    # TODO(synk): if a profile shows exposed DMA around the finalize step, add
    # pipeline_mode=pl.Buffered(3) on the two input BlockSpecs (VMEM headroom exists).
    out = pl.pallas_call(
        kernel,
        out_shape=jax.ShapeDtypeStruct((N, 8, _LANES), jnp.float32),
        grid_spec=pltpu.PrefetchScalarGridSpec(
            num_scalar_prefetch=0,
            grid=(N, num_k),
            in_specs=[
                pl.BlockSpec((1, tr, _LANES), lambda n, k: (n, k, 0)),
                pl.BlockSpec((1, tr, _LANES), lambda n, k: (n, k, 0)),
            ],
            out_specs=pl.BlockSpec((1, 8, _LANES), lambda n, k: (n, 0, 0)),
            scratch_shapes=[
                pltpu.VMEM((8, _LANES), jnp.float32),   # bce partial sums
                pltpu.VMEM((8, _LANES), jnp.float32),   # dice numerator partials
                pltpu.VMEM((8, _LANES), jnp.float32),   # dice denominator partials
            ],
        ),
        compiler_params=pltpu.CompilerParams(
            dimension_semantics=("parallel", "arbitrary"),
            vmem_limit_bytes=vmem_limit),
        cost_estimate=cost,
    )(p3, t3)
    return out[:, 0, 0]


def _reference(predict, target):
    # pure-JAX reference of the PyTorch forward (defaults)
    N = predict.shape[0]
    p = predict.reshape(N, -1).astype(jnp.float32)
    t = target.reshape(N, -1).astype(jnp.float32)
    pc = jnp.maximum(p, BCE_SMOOTH)
    bce = -(t * jnp.log(pc + BCE_SMOOTH) + (1 - t) * jnp.log(1 - pc + BCE_SMOOTH)) / 2.0
    bce_mean = bce.mean(axis=1)
    num = 2 * jnp.sum(p * t, axis=1) + DICE_SMOOTH
    den = jnp.sum(p * p + t * t, axis=1) + DICE_SMOOTH
    dice = 1 - num / den
    return (bce_mean + dice) / 2.0


if __name__ == "__main__":
    key = jax.random.PRNGKey(0)
    k1, k2, k3, k4 = jax.random.split(key, 4)

    # Test 1: 128-aligned flattened length (no pad, no mask), default tiling.
    N, C, H, W = 2, 4, 16, 16
    predict = jax.nn.sigmoid(jax.random.normal(k1, (N, C, H, W), dtype=jnp.float32))
    target = (jax.random.uniform(k2, (N, C, H, W)) > 0.5).astype(jnp.float32)

    loss = bce_dice_loss(predict, target)
    jax.block_until_ready(loss)
    ref = _reference(predict, target)
    assert loss.shape == (N,)
    assert jnp.allclose(loss, ref, atol=1e-5, rtol=1e-5), (loss, ref)

    # Hard-target single-log fast path (targets are exactly {0,1} here).
    loss_h = bce_dice_loss(predict, target, hard_targets=True)
    jax.block_until_ready(loss_h)
    assert jnp.allclose(loss_h, ref, atol=1e-5, rtol=1e-5), (loss_h, ref)

    # Test 2: non-128-aligned length + multi-tile reduction (exercises tail mask).
    shape2 = (2, 1, 40, 33)   # L = 1320
    predict2 = jax.nn.sigmoid(jax.random.normal(k3, shape2, dtype=jnp.float32))
    target2 = (jax.random.uniform(k4, shape2) > 0.5).astype(jnp.float32)
    loss2 = bce_dice_loss(predict2, target2, row_block=8)
    jax.block_until_ready(loss2)
    ref2 = _reference(predict2, target2)
    assert jnp.allclose(loss2, ref2, atol=1e-5, rtol=1e-5), (loss2, ref2)

    print("KERNEL_OK")
</pallas_src>

<mosaic_0001>
module attributes {stable_mosaic.version = 11 : i64} {
  func.func @_bce_dice_kernel(%arg0: i32, %arg1: i32, %arg2: memref<1x8x128xf32, #tpu.memory_space<vmem>>, %arg3: memref<1x8x128xf32, #tpu.memory_space<vmem>>, %arg4: memref<1x8x128xf32, #tpu.memory_space<vmem>>, %arg5: memref<8x128xf32, #tpu.memory_space<vmem>>, %arg6: memref<8x128xf32, #tpu.memory_space<vmem>>, %arg7: memref<8x128xf32, #tpu.memory_space<vmem>>) attributes {dimension_semantics = [#tpu.dimension_semantics<parallel>, #tpu.dimension_semantics<arbitrary>], iteration_bounds = array<i64: 2, 1>, scalar_prefetch = 0 : i64, scratch_operands = 3 : i64, tpu.core_type = #tpu.core_type<tc>, window_params = [{transform_indices = @transform_0, window_bounds = array<i64: 1, 8, 128>}, {transform_indices = @transform_1, window_bounds = array<i64: 1, 8, 128>}, {transform_indices = @transform_2, window_bounds = array<i64: 1, 8, 128>}]} {
    %c0_i32 = arith.constant 0 : i32
    %0 = arith.cmpi eq, %arg1, %c0_i32 : i32
    %1 = arith.extui %0 : i1 to i32
    %c0_i32_0 = arith.constant 0 : i32
    %2 = arith.cmpi ne, %1, %c0_i32_0 : i32
    scf.if %2 {
      %cst_31 = arith.constant 0.000000e+00 : f32
      %52 = vector.broadcast %cst_31 : f32 to vector<8x128xf32>
      %c0_32 = arith.constant 0 : index
      %c0_33 = arith.constant 0 : index
      %53 = vector.load %arg5[%c0_32, %c0_33] : memref<8x128xf32, #tpu.memory_space<vmem>>, vector<8x128xf32>
      tpu.vector_store %arg5[%c0_32, %c0_33], %52 {strides = array<i32>} : memref<8x128xf32, #tpu.memory_space<vmem>>, vector<8x128xf32>,
      %cst_34 = arith.constant 0.000000e+00 : f32
      %54 = vector.broadcast %cst_34 : f32 to vector<8x128xf32>
      %c0_35 = arith.constant 0 : index
      %c0_36 = arith.constant 0 : index
      %55 = vector.load %arg6[%c0_35, %c0_36] : memref<8x128xf32, #tpu.memory_space<vmem>>, vector<8x128xf32>
      tpu.vector_store %arg6[%c0_35, %c0_36], %54 {strides = array<i32>} : memref<8x128xf32, #tpu.memory_space<vmem>>, vector<8x128xf32>,
      %cst_37 = arith.constant 0.000000e+00 : f32
      %56 = vector.broadcast %cst_37 : f32 to vector<8x128xf32>
      %c0_38 = arith.constant 0 : index
      %c0_39 = arith.constant 0 : index
      %57 = vector.load %arg7[%c0_38, %c0_39] : memref<8x128xf32, #tpu.memory_space<vmem>>, vector<8x128xf32>
      tpu.vector_store %arg7[%c0_38, %c0_39], %56 {strides = array<i32>} : memref<8x128xf32, #tpu.memory_space<vmem>>, vector<8x128xf32>,
    } else {
    }
    %c0 = arith.constant 0 : index
    %c0_1 = arith.constant 0 : index
    %c0_2 = arith.constant 0 : index
    %3 = vector.load %arg2[%c0, %c0_1, %c0_2] : memref<1x8x128xf32, #tpu.memory_space<vmem>>, vector<1x8x128xf32>
    %4 = vector.shape_cast %3 : vector<1x8x128xf32> to vector<8x128xf32>
    %c0_3 = arith.constant 0 : index
    %c0_4 = arith.constant 0 : index
    %c0_5 = arith.constant 0 : index
    %5 = vector.load %arg3[%c0_3, %c0_4, %c0_5] : memref<1x8x128xf32, #tpu.memory_space<vmem>>, vector<1x8x128xf32>
    %6 = vector.shape_cast %5 : vector<1x8x128xf32> to vector<8x128xf32>
    %cst = arith.constant 9.99999993E-9 : f32
    %7 = vector.broadcast %cst : f32 to vector<8x128xf32>
    %8 = arith.maximumf %4, %7 : vector<8x128xf32>
    %cst_6 = arith.constant 9.99999993E-9 : f32
    %9 = vector.broadcast %cst_6 : f32 to vector<8x128xf32>
    %10 = arith.addf %8, %9 : vector<8x128xf32>
    %11 = math.log %10 : vector<8x128xf32>
    %cst_7 = arith.constant 1.000000e+00 : f32
    %12 = vector.broadcast %cst_7 : f32 to vector<8x128xf32>
    %13 = arith.subf %12, %8 : vector<8x128xf32>
    %cst_8 = arith.constant 9.99999993E-9 : f32
    %14 = vector.broadcast %cst_8 : f32 to vector<8x128xf32>
    %15 = arith.addf %13, %14 : vector<8x128xf32>
    %16 = math.log %15 : vector<8x128xf32>
    %cst_9 = arith.constant 1.000000e+00 : f32
    %17 = vector.broadcast %cst_9 : f32 to vector<8x128xf32>
    %18 = arith.mulf %17, %16 : vector<8x128xf32>
    %cst_10 = arith.constant 1.000000e+00 : f32
    %19 = vector.broadcast %cst_10 : f32 to vector<8x128xf32>
    %20 = arith.mulf %19, %11 : vector<8x128xf32>
    %cst_11 = arith.constant 1.000000e+00 : f32
    %21 = vector.broadcast %cst_11 : f32 to vector<8x128xf32>
    %22 = arith.mulf %21, %16 : vector<8x128xf32>
    %23 = arith.subf %20, %22 : vector<8x128xf32>
    %24 = arith.mulf %6, %23 : vector<8x128xf32>
    %25 = arith.addf %18, %24 : vector<8x128xf32>
    %cst_12 = arith.constant 0.000000e+00 : f32
    %26 = vector.broadcast %cst_12 : f32 to vector<8x128xf32>
    %27 = arith.subf %26, %25 : vector<8x128xf32>
    %cst_13 = arith.constant 5.000000e-01 : f32
    %28 = vector.broadcast %cst_13 : f32 to vector<8x128xf32>
    %29 = arith.mulf %27, %28 : vector<8x128xf32>
    %c0_14 = arith.constant 0 : index
    %c0_15 = arith.constant 0 : index
    %30 = vector.load %arg5[%c0_14, %c0_15] : memref<8x128xf32, #tpu.memory_space<vmem>>, vector<8x128xf32>
    %31 = vector.shape_cast %29 : vector<8x128xf32> to vector<1x8x128xf32>
    %cst_16 = arith.constant dense<0.000000e+00> : vector<8x128xf32>
    %32 = vector.multi_reduction <add>, %31, %cst_16 [0] : vector<1x8x128xf32> to vector<8x128xf32>
    %33 = arith.addf %30, %32 : vector<8x128xf32>
    %c0_17 = arith.constant 0 : index
    %c0_18 = arith.constant 0 : index
    %34 = vector.load %arg5[%c0_17, %c0_18] : memref<8x128xf32, #tpu.memory_space<vmem>>, vector<8x128xf32>
    tpu.vector_store %arg5[%c0_17, %c0_18], %33 {strides = array<i32>} : memref<8x128xf32, #tpu.memory_space<vmem>>, vector<8x128xf32>,
    %c0_19 = arith.constant 0 : index
    %c0_20 = arith.constant 0 : index
    %35 = vector.load %arg6[%c0_19, %c0_20] : memref<8x128xf32, #tpu.memory_space<vmem>>, vector<8x128xf32>
    %36 = arith.mulf %4, %6 : vector<8x128xf32>
    %37 = vector.shape_cast %36 : vector<8x128xf32> to vector<1x8x128xf32>
    %cst_21 = arith.constant dense<0.000000e+00> : vector<8x128xf32>
    %38 = vector.multi_reduction <add>, %37, %cst_21 [0] : vector<1x8x128xf32> to vector<8x128xf32>
    %39 = arith.addf %35, %38 : vector<8x128xf32>
    %c0_22 = arith.constant 0 : index
    %c0_23 = arith.constant 0 : index
    %40 = vector.load %arg6[%c0_22, %c0_23] : memref<8x128xf32, #tpu.memory_space<vmem>>, vector<8x128xf32>
    tpu.vector_store %arg6[%c0_22, %c0_23], %39 {strides = array<i32>} : memref<8x128xf32, #tpu.memory_space<vmem>>, vector<8x128xf32>,
    %c0_24 = arith.constant 0 : index
    %c0_25 = arith.constant 0 : index
    %41 = vector.load %arg7[%c0_24, %c0_25] : memref<8x128xf32, #tpu.memory_space<vmem>>, vector<8x128xf32>
    %42 = arith.mulf %4, %4 : vector<8x128xf32>
    %43 = arith.mulf %6, %6 : vector<8x128xf32>
    %44 = arith.addf %42, %43 : vector<8x128xf32>
    %45 = vector.shape_cast %44 : vector<8x128xf32> to vector<1x8x128xf32>
    %cst_26 = arith.constant dense<0.000000e+00> : vector<8x128xf32>
    %46 = vector.multi_reduction <add>, %45, %cst_26 [0] : vector<1x8x128xf32> to vector<8x128xf32>
    %47 = arith.addf %41, %46 : vector<8x128xf32>
    %c0_27 = arith.constant 0 : index
    %c0_28 = arith.constant 0 : index
    %48 = vector.load %arg7[%c0_27, %c0_28] : memref<8x128xf32, #tpu.memory_space<vmem>>, vector<8x128xf32>
    tpu.vector_store %arg7[%c0_27, %c0_28], %47 {strides = array<i32>} : memref<8x128xf32, #tpu.memory_space<vmem>>, vector<8x128xf32>,
    %c0_i32_29 = arith.constant 0 : i32
    %49 = arith.cmpi eq, %arg1, %c0_i32_29 : i32
    %50 = arith.extui %49 : i1 to i32
    %c0_i32_30 = arith.constant 0 : i32
    %51 = arith.cmpi ne, %50, %c0_i32_30 : i32
    scf.if %51 {
      %c0_31 = arith.constant 0 : index
      %c0_32 = arith.constant 0 : index
      %52 = vector.load %arg5[%c0_31, %c0_32] : memref<8x128xf32, #tpu.memory_space<vmem>>, vector<8x128xf32>
      %53 = vector.shape_cast %52 : vector<8x128xf32> to vector<1x8x128xf32>
      %cst_33 = arith.constant dense<0.000000e+00> : vector<1xf32>
      %54 = vector.multi_reduction <add>, %53, %cst_33 [1, 2] : vector<1x8x128xf32> to vector<1xf32>
      %55 = vector.shape_cast %54 : vector<1xf32> to vector<1x1x1xf32>
      %56 = vector.extract %55[0, 0, 0] : f32 from vector<1x1x1xf32>
      %57 = vector.broadcast %56 : f32 to vector<1x1xf32>
      %cst_34 = arith.constant 9.765625E-4 : f32
      %58 = vector.broadcast %cst_34 : f32 to vector<1x1xf32>
      %59 = arith.mulf %57, %58 : vector<1x1xf32>
      %c0_35 = arith.constant 0 : index
      %c0_36 = arith.constant 0 : index
      %60 = vector.load %arg6[%c0_35, %c0_36] : memref<8x128xf32, #tpu.memory_space<vmem>>, vector<8x128xf32>
      %61 = vector.shape_cast %60 : vector<8x128xf32> to vector<1x8x128xf32>
      %cst_37 = arith.constant dense<0.000000e+00> : vector<1xf32>
      %62 = vector.multi_reduction <add>, %61, %cst_37 [1, 2] : vector<1x8x128xf32> to vector<1xf32>
      %63 = vector.shape_cast %62 : vector<1xf32> to vector<1x1x1xf32>
      %64 = vector.extract %63[0, 0, 0] : f32 from vector<1x1x1xf32>
      %65 = vector.broadcast %64 : f32 to vector<1x1xf32>
      %cst_38 = arith.constant 2.000000e+00 : f32
      %66 = vector.broadcast %cst_38 : f32 to vector<1x1xf32>
      %67 = arith.mulf %66, %65 : vector<1x1xf32>
      %cst_39 = arith.constant 9.99999997E-7 : f32
      %68 = vector.broadcast %cst_39 : f32 to vector<1x1xf32>
      %69 = arith.addf %67, %68 : vector<1x1xf32>
      %c0_40 = arith.constant 0 : index
      %c0_41 = arith.constant 0 : index
      %70 = vector.load %arg7[%c0_40, %c0_41] : memref<8x128xf32, #tpu.memory_space<vmem>>, vector<8x128xf32>
      %71 = vector.shape_cast %70 : vector<8x128xf32> to vector<1x8x128xf32>
      %cst_42 = arith.constant dense<0.000000e+00> : vector<1xf32>
      %72 = vector.multi_reduction <add>, %71, %cst_42 [1, 2] : vector<1x8x128xf32> to vector<1xf32>
      %73 = vector.shape_cast %72 : vector<1xf32> to vector<1x1x1xf32>
      %74 = vector.extract %73[0, 0, 0] : f32 from vector<1x1x1xf32>
      %75 = vector.broadcast %74 : f32 to vector<1x1xf32>
      %cst_43 = arith.constant 9.99999997E-7 : f32
      %76 = vector.broadcast %cst_43 : f32 to vector<1x1xf32>
      %77 = arith.addf %75, %76 : vector<1x1xf32>
      %78 = arith.divf %69, %77 : vector<1x1xf32>
      %cst_44 = arith.constant 1.000000e+00 : f32
      %79 = vector.broadcast %cst_44 : f32 to vector<1x1xf32>
      %80 = arith.subf %79, %78 : vector<1x1xf32>
      %cst_45 = arith.constant 1.000000e+00 : f32
      %81 = vector.broadcast %cst_45 : f32 to vector<1x1xf32>
      %82 = arith.mulf %81, %59 : vector<1x1xf32>
      %cst_46 = arith.constant 1.000000e+00 : f32
      %83 = vector.broadcast %cst_46 : f32 to vector<1x1xf32>
      %84 = arith.mulf %83, %80 : vector<1x1xf32>
      %85 = arith.addf %82, %84 : vector<1x1xf32>
      %cst_47 = arith.constant 5.000000e-01 : f32
      %86 = vector.broadcast %cst_47 : f32 to vector<1x1xf32>
      %87 = arith.mulf %85, %86 : vector<1x1xf32>
      %88 = vector.shape_cast %87 : vector<1x1xf32> to vector<1x1x1xf32>
      %89 = vector.broadcast %88 : vector<1x1x1xf32> to vector<1x8x128xf32>
      %c0_48 = arith.constant 0 : index
      %c0_49 = arith.constant 0 : index
      %c0_50 = arith.constant 0 : index
      %90 = vector.load %arg4[%c0_48, %c0_49, %c0_50] : memref<1x8x128xf32, #tpu.memory_space<vmem>>, vector<1x8x128xf32>
      tpu.vector_store %arg4[%c0_48, %c0_49, %c0_50], %89 {strides = array<i32>} : memref<1x8x128xf32, #tpu.memory_space<vmem>>, vector<1x8x128xf32>,
    } else {
    }
    return
  }
  func.func @transform_0(%arg0: i32, %arg1: i32) -> (i32, i32, i32) {
    %c0_i32 = arith.constant 0 : i32
    %c0_i32_0 = arith.constant 0 : i32
    return %arg0, %arg1, %c0_i32 : i32, i32, i32
  }
  func.func @transform_1(%arg0: i32, %arg1: i32) -> (i32, i32, i32) {
    %c0_i32 = arith.constant 0 : i32
    %c0_i32_0 = arith.constant 0 : i32
    return %arg0, %arg1, %c0_i32 : i32, i32, i32
  }
  func.func @transform_2(%arg0: i32, %arg1: i32) -> (i32, i32, i32) {
    %c0_i32 = arith.constant 0 : i32
    %c0_i32_0 = arith.constant 0 : i32
    %c0_i32_1 = arith.constant 0 : i32
    return %arg0, %c0_i32, %c0_i32_0 : i32, i32, i32
  }
}

</mosaic_0001>

<llo_original>
// kernel: tpu_custom_call.1
$region0: #{tpu_custom_call.1}
  #allocation0 [shape = 'u32[]', space=smem, size = 0x4, offset = 0x4, fixed_abs, tag = 'smem constant byte address 0x4 - core index']
  #allocation1 [shape = 'u32[144,128]{1,0:T(1,128)}', space=vmem, size = 0x12000, scoped, tag = 'internal scratch']
  #allocation2 [shape = 'f32[8,128]{1,0:T(8,128)}', space=vmem, size = 0x1000, scoped, tag = 'scratch operand']
  #allocation3 [shape = 'f32[8,128]{1,0:T(8,128)}', space=vmem, size = 0x1000, scoped, tag = 'scratch operand']
  #allocation4 [shape = 'f32[8,128]{1,0:T(8,128)}', space=vmem, size = 0x1000, scoped, tag = 'scratch operand']
  %s0 = inlined_call_operand.hbm [shape: f32[2,8,128], index: 0, kind: input, shape index: {}]
  %s1 = inlined_call_operand.hbm [shape: f32[2,8,128], index: 1, kind: input, shape index: {}]
  %s2 = inlined_call_operand.hbm [shape: f32[2,8,128], index: 2, kind: output, shape index: {}]
  %s3 = sld [smem:[#allocation0]]
  $region57: #{tpu_custom_call.1} parent=0
    _
  %s5 = ssub.s32 1, %s3
  %s6 = scalar_select 0, %s5, %s3
  $region1: #{tpu_custom_call.1} parent=0
    #allocation5 [shape = 'u8[8192]{0}', space=vmem, size = 0x2000, scoped, tag = 'input window, operand 0']
    #allocation6 [shape = 's32[2]{0}', space=sflag, size = 0x8, scoped, tag = 'scoped memory for tpu_custom_call.1']
    #allocation7 [shape = 's32[2]{0}', space=sflag, size = 0x8, scoped, tag = 'scoped memory for tpu_custom_call.1']
    #allocation8 [shape = 'u8[8192]{0}', space=vmem, size = 0x2000, scoped, tag = 'input window, operand 1']
    #allocation9 [shape = 's32[2]{0}', space=sflag, size = 0x8, scoped, tag = 'scoped memory for tpu_custom_call.1']
    #allocation10 [shape = 'u8[8192]{0}', space=vmem, size = 0x2000, scoped, tag = 'output window, operand 0']
    %7 = vsyncpa [#allocation6], 0
    %s8 = scalar_lea.sflag [#allocation6], 1
    %9 = vsyncpa %s8, 0
    %10 = vsyncpa [#allocation9], 0
    %s11 = scalar_lea.sflag [#allocation9], 1
    %12 = vsyncpa %s11, 0
    %13 = vsyncpa [#allocation7], 0
    %s14 = scalar_lea.sflag [#allocation7], 1
    %15 = vsyncpa %s14, 0
    loop: start=0, step=1, limit=4
    $region2: #{tpu_custom_call.1} parent=1 // loop_pre_header
      _
    $region3: #{tpu_custom_call.1} parent=1 // loop_header
      %s17 = sphi 0, %s21
      %p18 = scmp.ge.s32.totalorder %s17, 4
      %s24 = sphi 0, %s36
      %s25 = sphi 0, %s32
      %s26 = sphi 0, %s24
      %s27 = sphi 0, %s25
      %s28 = sphi 0, %s26
      %s29 = sphi 0, %s27
      %s41 = sphi 0, %s43
      %s44 = sphi 0, %s41
      %s45 = sphi 0, %s44
      %s61 = sphi 0, %s45
      %s69 = sphi 0, %s71
      %s72 = sphi 0, %s69
      %s73 = sphi 0, %s72
      %s89 = sphi 0, %s73
      %s95 = sphi 0, %s97
      %s98 = sphi 0, %s95
      %s99 = sphi 0, %s98
      %s115 = sphi 0, %s99
    $region4: #{tpu_custom_call.1} parent=1 // loop_header_branch
      %20 = sbr.rel (%p18) target = $region8
    $region5: #{tpu_custom_call.1} parent=1 // loop_body
      %s22 = ssub.s32 %s17, 1
      %s23 = ssub.s32 %s17, 2
      %s30 = sadd.s32 1, %s25
      %p31 = scmp.ge.s32.totalorder %s30, 1
      %s32 = scalar_select %p31, 0, %s30
      %s33 = sadd.s32 1, %s24
      %s34 = scalar_select %p31, %s33, %s24
      %p35 = scmp.ge.s32.totalorder %s34, 2
      %s36 = scalar_select %p35, 0, %s34
      %s37 = ssub.s32 %s24, %s36
      %s38 = ssub.s32 %s25, %s32
      %s39 = sor.u32 %s37, %s38
      %p40 = scmp.eq.s32.totalorder %s39, 0
      %s42 = sadd.s32 %s41, 1
      %s43 = scalar_select %p40, %s41, %s42
      %p46 = pneg %p40
      %p47 = scmp.eq.s32.totalorder %s17, 1
      %p48 = por %p46, %p47
      %p49 = scmp.ne.s32.totalorder %s41, %s44
      %p50 = scmp.eq.s32.totalorder %s17, 0
      %p51 = por %p49, %p50
      %p52 = scmp.ne.s32.totalorder %s41, %s44
      %p53 = scmp.eq.s32.totalorder %s22, 1
      %p54 = por %p52, %p53
      %p55 = scmp.ne.s32.totalorder %s44, %s45
      %p56 = scmp.eq.s32.totalorder %s22, 0
      %p57 = por %p55, %p56
      %p58 = scmp.ne.s32.totalorder %s44, %s45
      %p59 = scmp.eq.s32.totalorder %s23, 1
      %p60 = por %p58, %p59
      %p62 = scmp.ne.s32.totalorder %s45, %s61
      %p63 = scmp.eq.s32.totalorder %s23, 0
      %p64 = por %p62, %p63
      %s65 = ssub.s32 %s24, %s36
      %s66 = ssub.s32 %s25, %s32
      %s67 = sor.u32 %s65, %s66
      %p68 = scmp.eq.s32.totalorder %s67, 0
      %s70 = sadd.s32 %s69, 1
      %s71 = scalar_select %p68, %s69, %s70
      %p74 = pneg %p68
      %p75 = scmp.eq.s32.totalorder %s17, 1
      %p76 = por %p74, %p75
      %p77 = scmp.ne.s32.totalorder %s69, %s72
      %p78 = scmp.eq.s32.totalorder %s17, 0
      %p79 = por %p77, %p78
      %p80 = scmp.ne.s32.totalorder %s69, %s72
      %p81 = scmp.eq.s32.totalorder %s22, 1
      %p82 = por %p80, %p81
      %p83 = scmp.ne.s32.totalorder %s72, %s73
      %p84 = scmp.eq.s32.totalorder %s22, 0
      %p85 = por %p83, %p84
      %p86 = scmp.ne.s32.totalorder %s72, %s73
      %p87 = scmp.eq.s32.totalorder %s23, 1
      %p88 = por %p86, %p87
      %p90 = scmp.ne.s32.totalorder %s73, %s89
      %p91 = scmp.eq.s32.totalorder %s23, 0
      %p92 = por %p90, %p91
      %s93 = ssub.s32 %s24, %s36
      %p94 = scmp.eq.s32.totalorder %s93, 0
      %s96 = sadd.s32 %s95, 1
      %s97 = scalar_select %p94, %s95, %s96
      %p100 = pneg %p94
      %p101 = scmp.eq.s32.totalorder %s17, 1
      %p102 = por %p100, %p101
      %p103 = scmp.ne.s32.totalorder %s95, %s98
      %p104 = scmp.eq.s32.totalorder %s17, 0
      %p105 = por %p103, %p104
      %p106 = scmp.ne.s32.totalorder %s95, %s98
      %p107 = scmp.eq.s32.totalorder %s22, 1
      %p108 = por %p106, %p107
      %p109 = scmp.ne.s32.totalorder %s98, %s99
      %p110 = scmp.eq.s32.totalorder %s22, 0
      %p111 = por %p109, %p110
      %p112 = scmp.ne.s32.totalorder %s98, %s99
      %p113 = scmp.eq.s32.totalorder %s23, 1
      %p114 = por %p112, %p113
      %p116 = scmp.ne.s32.totalorder %s99, %s115
      %p117 = scmp.eq.s32.totalorder %s23, 0
      %p118 = por %p116, %p117
      %p119 = scmp.le.s32.totalorder 1, %s17
      %p120 = scmp.lt.s32.totalorder %s17, 3
      %p121 = pnand %p119, %p120
      %p122 = pneg %p121
      // Predicated region
      $region9: #{tpu_custom_call.1} parent=5 // pred_check
        _
      $region10: #{tpu_custom_call.1} parent=5 // pred_check_branch
        %124 = sbr.rel (%p121) target = $region12
      $region11: #{tpu_custom_call.1} parent=5 // pred_region
        %s125 = ssub.s32 %s17, 1
      $region12: #{tpu_custom_call.1} parent=5 // pred_fallthru
        _
      %p126 = scmp.lt.s32.totalorder %s17, 2
      // Predicated region
      $region13: #{tpu_custom_call.1} parent=5 // pred_check
        %p127 = pneg %p126
      $region14: #{tpu_custom_call.1} parent=5 // pred_check_branch
        %129 = sbr.rel (%p127) target = $region16
      $region15: #{tpu_custom_call.1} parent=5 // pred_region
        // Predicated region
        $region17: #{tpu_custom_call.1} parent=15 // pred_check
          %p130 = pneg %p51
        $region18: #{tpu_custom_call.1} parent=15 // pred_check_branch
          %132 = sbr.rel (%p130) target = $region20
        $region19: #{tpu_custom_call.1} parent=15 // pred_region
          %s133 = sand.u32 %s41, 1
          %s134 = scalar_lea.sflag [#allocation6], %s133
          %s135 = sand.u32 %s41, 1
          %s136 = smul.addr %s135, 8
          %s137 = scalar_lea.vmem [#allocation5], %s136
          %s139 = ssub.s32 128, 128
          %140 = vsyncadd %s134, %s139
          %s141 = sadd.s32 %s25, %s24
          %s142 = smul.addr %s141, 128
          %s143 = scalar_lea.hbm %s0, %s142
          %s145 = sshll.u32 %s137, 4
          %s146 = int_to_ptr.vmem [resolvable:$true] %s145
          %148 = dma.hbm_to_vmem [thread:$0]  %s143, 128, %s146, %s134
        $region20: #{tpu_custom_call.1} parent=15 // pred_fallthru
          _
        // Predicated region
        $region21: #{tpu_custom_call.1} parent=15 // pred_check
          %p149 = pneg %p79
        $region22: #{tpu_custom_call.1} parent=15 // pred_check_branch
          %151 = sbr.rel (%p149) target = $region24
        $region23: #{tpu_custom_call.1} parent=15 // pred_region
          %s152 = sand.u32 %s69, 1
          %s153 = scalar_lea.sflag [#allocation9], %s152
          %s154 = sand.u32 %s69, 1
          %s155 = smul.addr %s154, 8
          %s156 = scalar_lea.vmem [#allocation8], %s155
          %s158 = ssub.s32 128, 128
          %159 = vsyncadd %s153, %s158
          %s160 = sadd.s32 %s25, %s24
          %s161 = smul.addr %s160, 128
          %s162 = scalar_lea.hbm %s1, %s161
          %s164 = sshll.u32 %s156, 4
          %s165 = int_to_ptr.vmem [resolvable:$true] %s164
          %167 = dma.hbm_to_vmem [thread:$0]  %s162, 128, %s165, %s153
        $region24: #{tpu_custom_call.1} parent=15 // pred_fallthru
          _
      $region16: #{tpu_custom_call.1} parent=5 // pred_fallthru
        _
      %p168 = scmp.le.s32.totalorder 1, %s17
      %p169 = scmp.lt.s32.totalorder %s17, 3
      %p170 = pnand %p168, %p169
      %p171 = pneg %p170
      // Predicated region
      $region25: #{tpu_custom_call.1} parent=5 // pred_check
        _
      $region26: #{tpu_custom_call.1} parent=5 // pred_check_branch
        %173 = sbr.rel (%p170) target = $region28
      $region27: #{tpu_custom_call.1} parent=5 // pred_region
        %s174 = ssub.s32 %s17, 1
        %s175 = sand.u32 %s44, 1
        %s176 = scalar_lea.sflag [#allocation6], %s175
        %s177 = sand.u32 %s44, 1
        %s178 = smul.addr %s177, 8
        %s179 = scalar_lea.vmem [#allocation5], %s178
        // Predicated region
        $region29: #{tpu_custom_call.1} parent=27 // pred_check
          %p180 = pneg %p57
        $region30: #{tpu_custom_call.1} parent=27 // pred_check_branch
          %182 = sbr.rel (%p180) target = $region32
        $region31: #{tpu_custom_call.1} parent=27 // pred_region
          %183 = dma.done %s176, 128
        $region32: #{tpu_custom_call.1} parent=27 // pred_fallthru
          _
        %s184 = sand.u32 %s72, 1
        %s185 = scalar_lea.sflag [#allocation9], %s184
        %s186 = sand.u32 %s72, 1
        %s187 = smul.addr %s186, 8
        %s188 = scalar_lea.vmem [#allocation8], %s187
        // Predicated region
        $region33: #{tpu_custom_call.1} parent=27 // pred_check
          %p189 = pneg %p85
        $region34: #{tpu_custom_call.1} parent=27 // pred_check_branch
          %191 = sbr.rel (%p189) target = $region36
        $region35: #{tpu_custom_call.1} parent=27 // pred_region
          %192 = dma.done %s185, 128
        $region36: #{tpu_custom_call.1} parent=27 // pred_fallthru
          _
        %s193 = sand.u32 %s44, 1
        %s194 = scalar_lea.sflag [#allocation6], %s193
        %s195 = sand.u32 %s44, 1
        %s196 = smul.addr %s195, 8
        %s197 = scalar_lea.vmem [#allocation5], %s196
        %p198 = pneg %p57
        %p199 = pneg %p54
        %s200 = sand.u32 %s72, 1
        %s201 = scalar_lea.sflag [#allocation9], %s200
        %s202 = sand.u32 %s72, 1
        %s203 = smul.addr %s202, 8
        %s204 = scalar_lea.vmem [#allocation8], %s203
        %p205 = pneg %p85
        %p206 = pneg %p82
        %p207 = pneg %p111
        %p208 = pneg %p108
        %s209 = sand.u32 %s98, 1
        %s210 = scalar_lea.sflag [#allocation7], %s209
        %s211 = sand.u32 %s98, 1
        %s212 = smul.addr %s211, 8
        %s213 = scalar_lea.vmem [#allocation10], %s212
        %p214 = scmp.eq.s32.totalorder %s27, 0
        // Predicated region
        $region37: #{tpu_custom_call.1} parent=27 // pred_check
          %p215 = pneg %p214
        $region38: #{tpu_custom_call.1} parent=27 // pred_check_branch
          %217 = sbr.rel (%p215) target = $region40
        $region39: #{tpu_custom_call.1} parent=27 // pred_region
          %218 = vst [vmem:[#allocation2] sm:$0xff] 0.0
          %219 = vst [vmem:[#allocation3] sm:$0xff] 0.0
          %220 = vst [vmem:[#allocation4] sm:$0xff] 0.0
        $region40: #{tpu_custom_call.1} parent=27 // pred_fallthru
          _
        %v221 = vld [vmem:[%s179] sm:$0xff]
        %v222 = vld [vmem:[%s188] sm:$0xff]
        %v223 = vmax.f32 %v221, 1e-08
        %v224 = vadd.f32 %v223, 1e-08
        %v225 = vlog2.pop %v224
        %v226 = vmul.f32 %v225, 0.6931472
        %v227 = vsub.f32 1.0, %v223
        %v228 = vadd.f32 %v227, 1e-08
        %v229 = vlog2.pop %v228
        %v230 = vmul.f32 %v229, 0.6931472
        %v231 = vsub.f32 %v226, %v230
        %v232 = vmul.f32 %v222, %v231
        %v233 = vadd.f32 %v230, %v232
        %v234 = vsub.f32 0.0, %v233
        %v235 = vmul.f32 %v234, 0.5
        %v236 = vld [vmem:[#allocation2] sm:$0xff]
        %v237 = vadd.f32 %v235, 0.0
        %v238 = vadd.f32 %v236, %v237
        %239 = vst [vmem:[#allocation2] sm:$0xff] %v238
        %v240 = vld [vmem:[#allocation3] sm:$0xff]
        %v241 = vmul.f32 %v221, %v222
        %v242 = vadd.f32 %v241, 0.0
        %v243 = vadd.f32 %v240, %v242
        %244 = vst [vmem:[#allocation3] sm:$0xff] %v243
        %v245 = vld [vmem:[#allocation4] sm:$0xff]
        %v246 = vmul.f32 %v221, %v221
        %v247 = vmul.f32 %v222, %v222
        %v248 = vadd.f32 %v246, %v247
        %v249 = vadd.f32 %v248, 0.0
        %v250 = vadd.f32 %v245, %v249
        %251 = vst [vmem:[#allocation4] sm:$0xff] %v250
        // Predicated region
        $region41: #{tpu_custom_call.1} parent=27 // pred_check
          %p252 = pneg %p214
        $region42: #{tpu_custom_call.1} parent=27 // pred_check_branch
          %254 = sbr.rel (%p252) target = $region44
        $region43: #{tpu_custom_call.1} parent=27 // pred_region
          %v255 = vld [vmem:[#allocation2] sm:$0xff]
          %256 = vadd.xlane.f32.xlu0 %v255
          %v257 = vpop.xlane.xlu0 %256
          %v258 = vrot.slane %v257, 4
          %v259 = vadd.f32 %v257, %v258
          %v260 = vrot.slane %v259, 2
          %v261 = vadd.f32 %v259, %v260
          %v262 = vrot.slane %v261, 1
          %v263 = vadd.f32 %v261, %v262
          %s264 = vtos %v263
          %v265 = vstv %s264
          %v266 = vmul.f32 %v265, 0.0009765625
          %v267 = vld [vmem:[#allocation3] sm:$0xff]
          %268 = vadd.xlane.f32.xlu0 %v267
          %v269 = vpop.xlane.xlu0 %268
          %v270 = vrot.slane %v269, 4
          %v271 = vadd.f32 %v269, %v270
          %v272 = vrot.slane %v271, 2
          %v273 = vadd.f32 %v271, %v272
          %v274 = vrot.slane %v273, 1
          %v275 = vadd.f32 %v273, %v274
          %s276 = vtos %v275
          %v277 = vstv %s276
          %v278 = vmul.f32 %v277, 2.0
          %v279 = vadd.f32 %v278, 1e-06
          %v280 = vld [vmem:[#allocation4] sm:$0xff]
          %281 = vadd.xlane.f32.xlu0 %v280
          %v282 = vpop.xlane.xlu0 %281
          %v283 = vrot.slane %v282, 4
          %v284 = vadd.f32 %v282, %v283
          %v285 = vrot.slane %v284, 2
          %v286 = vadd.f32 %v284, %v285
          %v287 = vrot.slane %v286, 1
          %v288 = vadd.f32 %v286, %v287
          %s289 = vtos %v288
          %v290 = vstv %s289
          %v291 = vadd.f32 %v290, 1e-06
          %v292 = vrcp.pop %v291
          %v293 = vmul.f32 %v279, %v292
          %v294 = vsub.f32 1.0, %v293
          %v295 = vadd.f32 %v266, %v294
          %v296 = vmul.f32 %v295, 0.5
          %297 = vst [vmem:[%s213] sm:$0xff] %v296
        $region44: #{tpu_custom_call.1} parent=27 // pred_fallthru
          _
        %s298 = sand.u32 %s98, 1
        %s299 = scalar_lea.sflag [#allocation7], %s298
        %s300 = sand.u32 %s98, 1
        %s301 = smul.addr %s300, 8
        %s302 = scalar_lea.vmem [#allocation10], %s301
        // Predicated region
        $region45: #{tpu_custom_call.1} parent=27 // pred_check
          %p303 = pneg %p108
        $region46: #{tpu_custom_call.1} parent=27 // pred_check_branch
          %305 = sbr.rel (%p303) target = $region48
        $region47: #{tpu_custom_call.1} parent=27 // pred_region
          %s307 = ssub.s32 128, 128
          %308 = vsyncadd %s299, %s307
          %s309 = smul.addr %s26, 128
          %s310 = scalar_lea.hbm %s2, %s309
          %s312 = sshll.u32 %s302, 4
          %s313 = int_to_ptr.vmem [resolvable:$true] %s312
          %315 = dma.vmem_to_hbm [thread:$0]  %s313, 128, %s310, %s299
        $region48: #{tpu_custom_call.1} parent=27 // pred_fallthru
          _
      $region28: #{tpu_custom_call.1} parent=5 // pred_fallthru
        _
      %p316 = scmp.le.s32.totalorder 2, %s17
      // Predicated region
      $region49: #{tpu_custom_call.1} parent=5 // pred_check
        %p317 = pneg %p316
      $region50: #{tpu_custom_call.1} parent=5 // pred_check_branch
        %319 = sbr.rel (%p317) target = $region52
      $region51: #{tpu_custom_call.1} parent=5 // pred_region
        %s320 = ssub.s32 %s17, 2
        // Predicated region
        $region53: #{tpu_custom_call.1} parent=51 // pred_check
          %p321 = pneg %p114
        $region54: #{tpu_custom_call.1} parent=51 // pred_check_branch
          %323 = sbr.rel (%p321) target = $region56
        $region55: #{tpu_custom_call.1} parent=51 // pred_region
          %s324 = sand.u32 %s99, 1
          %s325 = scalar_lea.sflag [#allocation7], %s324
          %s326 = sand.u32 %s99, 1
          %s327 = smul.addr %s326, 8
          %s328 = scalar_lea.vmem [#allocation10], %s327
          %329 = dma.done %s325, 128
        $region56: #{tpu_custom_call.1} parent=51 // pred_fallthru
          _
      $region52: #{tpu_custom_call.1} parent=5 // pred_fallthru
        _
    $region6: #{tpu_custom_call.1} parent=1 // loop_footer
      %s21 = sadd.s32 1, %s17
    $region7: #{tpu_custom_call.1} parent=1 // loop_footer_branch
      %16 = sbr.rel target = $region3
    $region8: #{tpu_custom_call.1} parent=1 // loop_exit
      _
    %330 = vsyncpa [#allocation6], 1
    %s331 = scalar_lea.sflag [#allocation6], 1
    %332 = vsyncpa %s331, 1
    %333 = vsyncpa [#allocation9], 1
    %s334 = scalar_lea.sflag [#allocation9], 1
    %335 = vsyncpa %s334, 1
    %336 = vsyncpa [#allocation7], 1
    %s337 = scalar_lea.sflag [#allocation7], 1
    %338 = vsyncpa %s337, 1

</llo_original>
